<compile_context>
chip_gen: v7x
topology: tpu7x:2x2x1
jax: 0.10.0
libtpu: 0.0.40
codegen_flags: <defaults>
</compile_context>

<pallas_src>
import math
import numpy as np
import jax
import jax.numpy as jnp
from jax.experimental import pallas as pl
from jax.experimental.pallas import tpu as pltpu


# ---------------------------------------------------------------------------
# Kernel: one (batch, L-tile) block of the complex channel matmul.
# ---------------------------------------------------------------------------
def _complex_conv_kernel(xr_ref, xi_ref, wr_ref, wi_ref, br_ref, bi_ref,
                         yr_ref, yi_ref):
    f32 = jnp.float32
    xr = xr_ref[0]                     # (Cin, TL)
    xi = xi_ref[0]                     # (Cin, TL)
    wr = wr_ref[...]                   # (Cout, Cin)
    wi = wi_ref[...]                   # (Cout, Cin)

    rr = jnp.dot(wr, xr, preferred_element_type=f32)   # w_r * x_r
    ii = jnp.dot(wi, xi, preferred_element_type=f32)   # w_i * x_i
    ri = jnp.dot(wr, xi, preferred_element_type=f32)   # w_r * x_i
    ir = jnp.dot(wi, xr, preferred_element_type=f32)   # w_i * x_r

    # (Cout, 1) bias broadcasts across the lane (L) axis.
    yr_ref[0] = rr - ii + br_ref[...]
    yi_ref[0] = ri + ir + bi_ref[...]


def _round_up(x, m):
    return (x + m - 1) // m * m


# ---------------------------------------------------------------------------
# Wrapper: pad to (8, 128)-aligned blocks, launch a single pipelined grid.
# ---------------------------------------------------------------------------
def complex_conv_forward(x_r, x_i, w_r, w_i, b_r=None, b_i=None):
    """ComplexConv forward.

    x_r, x_i : (B, Cin, L)  real / imag parts of the complex input
    w_r, w_i : (Cout, Cin)  real / imag parts of the (kernel-size-1) weight
    b_r, b_i : optional (Cout,) real / imag parts of the complex bias
    Returns (y_r, y_i) with shape (B, Cout, L).
    """
    x_r = x_r.astype(jnp.float32)
    x_i = x_i.astype(jnp.float32)
    w_r = w_r.astype(jnp.float32)
    w_i = w_i.astype(jnp.float32)

    B, Cin, L = x_r.shape
    Cout = w_r.shape[0]

    # Pad channels to sublane multiples (8) and L to a lane multiple (128)
    # so every block is tile-aligned and output stores are lane-dense.
    Cin_p = max(_round_up(Cin, 8), 8)
    Cout_p = max(_round_up(Cout, 8), 8)
    L_p = _round_up(L, 128)

    # Largest tile (<= 2048 lanes) that divides L_p -> fewer grid steps.
    TL = 128
    for cand in (2048, 1024, 512, 256):
        if L_p % cand == 0:
            TL = cand
            break

    xr = jnp.pad(x_r, ((0, 0), (0, Cin_p - Cin), (0, L_p - L)))
    xi = jnp.pad(x_i, ((0, 0), (0, Cin_p - Cin), (0, L_p - L)))
    wr = jnp.pad(w_r, ((0, Cout_p - Cout), (0, Cin_p - Cin)))
    wi = jnp.pad(w_i, ((0, Cout_p - Cout), (0, Cin_p - Cin)))

    # Bias semantics of _apply_linear_complex:
    #   real gets (b_r - b_i), imag gets (b_r + b_i).
    if b_r is None:
        br_eff = jnp.zeros((Cout_p, 1), jnp.float32)
        bi_eff = jnp.zeros((Cout_p, 1), jnp.float32)
    else:
        b_r = b_r.astype(jnp.float32)
        b_i = b_i.astype(jnp.float32)
        br_eff = jnp.pad(b_r - b_i, (0, Cout_p - Cout)).reshape(Cout_p, 1)
        bi_eff = jnp.pad(b_r + b_i, (0, Cout_p - Cout)).reshape(Cout_p, 1)

    grid = (B, L_p // TL)
    yr, yi = pl.pallas_call(
        _complex_conv_kernel,
        out_shape=(jax.ShapeDtypeStruct((B, Cout_p, L_p), jnp.float32),
                   jax.ShapeDtypeStruct((B, Cout_p, L_p), jnp.float32)),
        grid=grid,
        in_specs=[
            pl.BlockSpec((1, Cin_p, TL), lambda b, l: (b, 0, l)),
            pl.BlockSpec((1, Cin_p, TL), lambda b, l: (b, 0, l)),
            pl.BlockSpec((Cout_p, Cin_p), lambda b, l: (0, 0)),
            pl.BlockSpec((Cout_p, Cin_p), lambda b, l: (0, 0)),
            pl.BlockSpec((Cout_p, 1), lambda b, l: (0, 0)),
            pl.BlockSpec((Cout_p, 1), lambda b, l: (0, 0)),
        ],
        out_specs=(
            pl.BlockSpec((1, Cout_p, TL), lambda b, l: (b, 0, l)),
            pl.BlockSpec((1, Cout_p, TL), lambda b, l: (b, 0, l)),
        ),
        compiler_params=pltpu.CompilerParams(
            dimension_semantics=("parallel", "parallel"),
            vmem_limit_bytes=64 * 1024 * 1024,
        ),
    )(xr, xi, wr, wi, br_eff, bi_eff)

    return yr[:, :Cout, :L], yi[:, :Cout, :L]


complex_conv_forward_jit = jax.jit(complex_conv_forward)


# ---------------------------------------------------------------------------
if __name__ == "__main__":
    key = jax.random.PRNGKey(0)
    B, Cin, Cout, L = 2, 32, 32, 256
    keys = jax.random.split(key, 8)

    # Complex input x = x_r + i*x_i, shape (B, Cin, L) like the conv1d input.
    x_r = jax.random.normal(keys[0], (B, Cin, L), jnp.float32)
    x_i = jax.random.normal(keys[1], (B, Cin, L), jnp.float32)

    # Complex weight (out, in, 1) as in the module (kaiming-style scale);
    # the trailing kernel-size-1 axis is squeezed for the matmul.
    std = math.sqrt(2.0 / Cin)
    w_r3 = jax.random.normal(keys[2], (Cout, Cin, 1), jnp.float32) * std
    w_i3 = jax.random.normal(keys[3], (Cout, Cin, 1), jnp.float32) * std
    # Nonzero complex bias to exercise the full bias path (bias=True case;
    # reset_parameters zeros it, but trained values may be nonzero).
    b_r = jax.random.normal(keys[4], (Cout,), jnp.float32) * 0.1
    b_i = jax.random.normal(keys[5], (Cout,), jnp.float32) * 0.1

    y_r, y_i = complex_conv_forward_jit(x_r, x_i,
                                        w_r3[..., 0], w_i3[..., 0],
                                        b_r, b_i)
    y_r = jax.block_until_ready(y_r)
    y_i = jax.block_until_ready(y_i)
    assert y_r.shape == (B, Cout, L) and y_i.shape == (B, Cout, L)

    # Pure-JAX reference (real arithmetic, same formula as the PyTorch module).
    wr, wi = w_r3[..., 0], w_i3[..., 0]
    yr_ref = (jnp.einsum("oi,bil->bol", wr, x_r)
              - jnp.einsum("oi,bil->bol", wi, x_i)
              + (b_r - b_i)[None, :, None])
    yi_ref = (jnp.einsum("oi,bil->bol", wr, x_i)
              + jnp.einsum("oi,bil->bol", wi, x_r)
              + (b_r + b_i)[None, :, None])

    np.testing.assert_allclose(np.asarray(y_r), np.asarray(yr_ref),
                               rtol=1e-5, atol=1e-5)
    np.testing.assert_allclose(np.asarray(y_i), np.asarray(yi_ref),
                               rtol=1e-5, atol=1e-5)
    assert bool(jnp.all(jnp.isfinite(y_r))) and bool(jnp.all(jnp.isfinite(y_i)))
    print("KERNEL_OK")
</pallas_src>

<mosaic_0001>
module attributes {stable_mosaic.version = 11 : i64} {
  func.func @_complex_conv_kernel(%arg0: i32, %arg1: i32, %arg2: memref<1x32x256xf32, #tpu.memory_space<vmem>>, %arg3: memref<1x32x256xf32, #tpu.memory_space<vmem>>, %arg4: memref<32x32xf32, #tpu.memory_space<vmem>>, %arg5: memref<32x32xf32, #tpu.memory_space<vmem>>, %arg6: memref<32x1xf32, #tpu.memory_space<vmem>>, %arg7: memref<32x1xf32, #tpu.memory_space<vmem>>, %arg8: memref<1x32x256xf32, #tpu.memory_space<vmem>>, %arg9: memref<1x32x256xf32, #tpu.memory_space<vmem>>) attributes {dimension_semantics = [#tpu.dimension_semantics<parallel>, #tpu.dimension_semantics<parallel>], iteration_bounds = array<i64: 2, 1>, scalar_prefetch = 0 : i64, scratch_operands = 0 : i64, tpu.core_type = #tpu.core_type<tc>, window_params = [{transform_indices = @transform_0, window_bounds = array<i64: 1, 32, 256>}, {transform_indices = @transform_1, window_bounds = array<i64: 1, 32, 256>}, {pipeline_mode = #tpu.pipeline_mode<synchronous>, transform_indices = @transform_2, window_bounds = array<i64: 32, 32>}, {pipeline_mode = #tpu.pipeline_mode<synchronous>, transform_indices = @transform_3, window_bounds = array<i64: 32, 32>}, {pipeline_mode = #tpu.pipeline_mode<synchronous>, transform_indices = @transform_4, window_bounds = array<i64: 32, 1>}, {pipeline_mode = #tpu.pipeline_mode<synchronous>, transform_indices = @transform_5, window_bounds = array<i64: 32, 1>}, {transform_indices = @transform_6, window_bounds = array<i64: 1, 32, 256>}, {transform_indices = @transform_7, window_bounds = array<i64: 1, 32, 256>}]} {
    %c0 = arith.constant 0 : index
    %c0_0 = arith.constant 0 : index
    %c0_1 = arith.constant 0 : index
    %0 = vector.load %arg2[%c0, %c0_0, %c0_1] : memref<1x32x256xf32, #tpu.memory_space<vmem>>, vector<1x32x256xf32>
    %1 = vector.shape_cast %0 : vector<1x32x256xf32> to vector<32x256xf32>
    %c0_2 = arith.constant 0 : index
    %c0_3 = arith.constant 0 : index
    %c0_4 = arith.constant 0 : index
    %2 = vector.load %arg3[%c0_2, %c0_3, %c0_4] : memref<1x32x256xf32, #tpu.memory_space<vmem>>, vector<1x32x256xf32>
    %3 = vector.shape_cast %2 : vector<1x32x256xf32> to vector<32x256xf32>
    %c0_5 = arith.constant 0 : index
    %c0_6 = arith.constant 0 : index
    %4 = vector.load %arg4[%c0_5, %c0_6] : memref<32x32xf32, #tpu.memory_space<vmem>>, vector<32x32xf32>
    %c0_7 = arith.constant 0 : index
    %c0_8 = arith.constant 0 : index
    %5 = vector.load %arg5[%c0_7, %c0_8] : memref<32x32xf32, #tpu.memory_space<vmem>>, vector<32x32xf32>
    %cst = arith.constant dense<0.000000e+00> : vector<32x256xf32>
    %6 = tpu.matmul %4, %1, %cst {dimension_numbers = #tpu.dot_dimension_numbers<[1], [0], [0], [1], [0, 0, 1, 1], [], []>} : vector<32x32xf32>, vector<32x256xf32>, vector<32x256xf32> -> vector<32x256xf32>
    %cst_9 = arith.constant dense<0.000000e+00> : vector<32x256xf32>
    %7 = tpu.matmul %5, %3, %cst_9 {dimension_numbers = #tpu.dot_dimension_numbers<[1], [0], [0], [1], [0, 0, 1, 1], [], []>} : vector<32x32xf32>, vector<32x256xf32>, vector<32x256xf32> -> vector<32x256xf32>
    %cst_10 = arith.constant dense<0.000000e+00> : vector<32x256xf32>
    %8 = tpu.matmul %4, %3, %cst_10 {dimension_numbers = #tpu.dot_dimension_numbers<[1], [0], [0], [1], [0, 0, 1, 1], [], []>} : vector<32x32xf32>, vector<32x256xf32>, vector<32x256xf32> -> vector<32x256xf32>
    %cst_11 = arith.constant dense<0.000000e+00> : vector<32x256xf32>
    %9 = tpu.matmul %5, %1, %cst_11 {dimension_numbers = #tpu.dot_dimension_numbers<[1], [0], [0], [1], [0, 0, 1, 1], [], []>} : vector<32x32xf32>, vector<32x256xf32>, vector<32x256xf32> -> vector<32x256xf32>
    %10 = arith.subf %6, %7 : vector<32x256xf32>
    %c0_12 = arith.constant 0 : index
    %c0_13 = arith.constant 0 : index
    %11 = vector.load %arg6[%c0_12, %c0_13] : memref<32x1xf32, #tpu.memory_space<vmem>>, vector<32x1xf32>
    %12 = vector.broadcast %11 : vector<32x1xf32> to vector<32x256xf32>
    %13 = arith.addf %10, %12 : vector<32x256xf32>
    %c0_14 = arith.constant 0 : index
    %c0_15 = arith.constant 0 : index
    %c0_16 = arith.constant 0 : index
    %14 = vector.load %arg8[%c0_14, %c0_15, %c0_16] : memref<1x32x256xf32, #tpu.memory_space<vmem>>, vector<1x32x256xf32>
    %15 = vector.shape_cast %14 : vector<1x32x256xf32> to vector<32x256xf32>
    %16 = vector.shape_cast %13 : vector<32x256xf32> to vector<1x32x256xf32>
    tpu.vector_store %arg8[%c0_14, %c0_15, %c0_16], %16 {strides = array<i32>} : memref<1x32x256xf32, #tpu.memory_space<vmem>>, vector<1x32x256xf32>,
    %17 = arith.addf %8, %9 : vector<32x256xf32>
    %c0_17 = arith.constant 0 : index
    %c0_18 = arith.constant 0 : index
    %18 = vector.load %arg7[%c0_17, %c0_18] : memref<32x1xf32, #tpu.memory_space<vmem>>, vector<32x1xf32>
    %19 = vector.broadcast %18 : vector<32x1xf32> to vector<32x256xf32>
    %20 = arith.addf %17, %19 : vector<32x256xf32>
    %c0_19 = arith.constant 0 : index
    %c0_20 = arith.constant 0 : index
    %c0_21 = arith.constant 0 : index
    %21 = vector.load %arg9[%c0_19, %c0_20, %c0_21] : memref<1x32x256xf32, #tpu.memory_space<vmem>>, vector<1x32x256xf32>
    %22 = vector.shape_cast %21 : vector<1x32x256xf32> to vector<32x256xf32>
    %23 = vector.shape_cast %20 : vector<32x256xf32> to vector<1x32x256xf32>
    tpu.vector_store %arg9[%c0_19, %c0_20, %c0_21], %23 {strides = array<i32>} : memref<1x32x256xf32, #tpu.memory_space<vmem>>, vector<1x32x256xf32>,
    return
  }
  func.func @transform_0(%arg0: i32, %arg1: i32) -> (i32, i32, i32) {
    %c0_i32 = arith.constant 0 : i32
    %c0_i32_0 = arith.constant 0 : i32
    return %arg0, %c0_i32, %arg1 : i32, i32, i32
  }
  func.func @transform_1(%arg0: i32, %arg1: i32) -> (i32, i32, i32) {
    %c0_i32 = arith.constant 0 : i32
    %c0_i32_0 = arith.constant 0 : i32
    return %arg0, %c0_i32, %arg1 : i32, i32, i32
  }
  func.func @transform_2(%arg0: i32, %arg1: i32) -> (i32, i32) {
    %c0_i32 = arith.constant 0 : i32
    %c0_i32_0 = arith.constant 0 : i32
    %c0_i32_1 = arith.constant 0 : i32
    return %c0_i32, %c0_i32_0 : i32, i32
  }
  func.func @transform_3(%arg0: i32, %arg1: i32) -> (i32, i32) {
    %c0_i32 = arith.constant 0 : i32
    %c0_i32_0 = arith.constant 0 : i32
    %c0_i32_1 = arith.constant 0 : i32
    return %c0_i32, %c0_i32_0 : i32, i32
  }
  func.func @transform_4(%arg0: i32, %arg1: i32) -> (i32, i32) {
    %c0_i32 = arith.constant 0 : i32
    %c0_i32_0 = arith.constant 0 : i32
    %c0_i32_1 = arith.constant 0 : i32
    return %c0_i32, %c0_i32_0 : i32, i32
  }
  func.func @transform_5(%arg0: i32, %arg1: i32) -> (i32, i32) {
    %c0_i32 = arith.constant 0 : i32
    %c0_i32_0 = arith.constant 0 : i32
    %c0_i32_1 = arith.constant 0 : i32
    return %c0_i32, %c0_i32_0 : i32, i32
  }
  func.func @transform_6(%arg0: i32, %arg1: i32) -> (i32, i32, i32) {
    %c0_i32 = arith.constant 0 : i32
    %c0_i32_0 = arith.constant 0 : i32
    return %arg0, %c0_i32, %arg1 : i32, i32, i32
  }
  func.func @transform_7(%arg0: i32, %arg1: i32) -> (i32, i32, i32) {
    %c0_i32 = arith.constant 0 : i32
    %c0_i32_0 = arith.constant 0 : i32
    return %arg0, %c0_i32, %arg1 : i32, i32, i32
  }
}

</mosaic_0001>

<llo_original>
// kernel: complex_conv_forward.1
$region0: #{complex_conv_forward.1}
  #allocation0 [shape = 'u32[]', space=smem, size = 0x4, offset = 0x4, fixed_abs, tag = 'smem constant byte address 0x4 - core index']
  #allocation1 [shape = 'u32[144,128]{1,0:T(1,128)}', space=vmem, size = 0x12000, scoped, tag = 'internal scratch']
  %s0 = inlined_call_operand.hbm [shape: f32[2,32,256], index: 0, kind: input, shape index: {}]
  %s1 = inlined_call_operand.hbm [shape: f32[2,32,256], index: 1, kind: input, shape index: {}]
  %s2 = inlined_call_operand.hbm [shape: f32[32,32], index: 2, kind: input, shape index: {}]
  %s3 = inlined_call_operand.hbm [shape: f32[32,32], index: 3, kind: input, shape index: {}]
  %s4 = inlined_call_operand.hbm [shape: f32[32,1], index: 4, kind: input, shape index: {}]
  %s5 = inlined_call_operand.hbm [shape: f32[32,1], index: 5, kind: input, shape index: {}]
  %s6 = inlined_call_operand.hbm [shape: f32[2,32,256], index: 6, kind: output, shape index: {0}]
  %s7 = inlined_call_operand.hbm [shape: f32[2,32,256], index: 7, kind: output, shape index: {1}]
  %8 = xla_tuple %s6, %s7
  %s9 = sld [smem:[#allocation0]]
  $region89: #{complex_conv_forward.1} parent=0
    _
  %s11 = ssub.s32 1, %s9
  %s12 = scalar_select 0, %s11, %s9
  $region1: #{complex_conv_forward.1} parent=0
    #allocation2 [shape = 'u8[65536]{0}', space=vmem, size = 0x10000, scoped, tag = 'input window, operand 0']
    #allocation3 [shape = 's32[2]{0}', space=sflag, size = 0x8, scoped, tag = 'scoped memory for complex_conv_forward.1']
    #allocation4 [shape = 's32[2]{0}', space=sflag, size = 0x8, scoped, tag = 'scoped memory for complex_conv_forward.1']
    #allocation5 [shape = 'u8[65536]{0}', space=vmem, size = 0x10000, scoped, tag = 'input window, operand 1']
    #allocation6 [shape = 's32[2]{0}', space=sflag, size = 0x8, scoped, tag = 'scoped memory for complex_conv_forward.1']
    #allocation7 [shape = 'u8[16384]{0}', space=vmem, size = 0x4000, scoped, tag = 'input window, operand 2, single buffered']
    #allocation8 [shape = 'u8[16384]{0}', space=vmem, size = 0x4000, scoped, tag = 'input window, operand 3, single buffered']
    #allocation9 [shape = 's32[1]{0}', space=sflag, size = 0x4, scoped, tag = 'scoped memory for complex_conv_forward.1']
    #allocation10 [shape = 'u8[16384]{0}', space=vmem, size = 0x4000, scoped, tag = 'input window, operand 4, single buffered']
    #allocation11 [shape = 'u8[16384]{0}', space=vmem, size = 0x4000, scoped, tag = 'input window, operand 5, single buffered']
    #allocation12 [shape = 's32[1]{0}', space=sflag, size = 0x4, scoped, tag = 'scoped memory for complex_conv_forward.1']
    #allocation13 [shape = 'u8[65536]{0}', space=vmem, size = 0x10000, scoped, tag = 'output window, operand 0']
    #allocation14 [shape = 'u8[65536]{0}', space=vmem, size = 0x10000, scoped, tag = 'output window, operand 1']
    #allocation15 [shape = 's32[2]{0}', space=sflag, size = 0x8, scoped, tag = 'scoped memory for complex_conv_forward.1']
    %13 = vsyncpa [#allocation3], 0
    %s14 = scalar_lea.sflag [#allocation3], 1
    %15 = vsyncpa %s14, 0
    %16 = vsyncpa [#allocation6], 0
    %s17 = scalar_lea.sflag [#allocation6], 1
    %18 = vsyncpa %s17, 0
    %19 = vsyncpa [#allocation9], 0
    %20 = vsyncpa [#allocation12], 0
    %21 = vsyncpa [#allocation4], 0
    %s22 = scalar_lea.sflag [#allocation4], 1
    %23 = vsyncpa %s22, 0
    %24 = vsyncpa [#allocation15], 0
    %s25 = scalar_lea.sflag [#allocation15], 1
    %26 = vsyncpa %s25, 0
    loop: start=0, step=1, limit=4
    $region2: #{complex_conv_forward.1} parent=1 // loop_pre_header
      _
    $region3: #{complex_conv_forward.1} parent=1 // loop_header
      %s28 = sphi 0, %s32
      %p29 = scmp.ge.s32.totalorder %s28, 4
      %s35 = sphi 0, %s47
      %s36 = sphi 0, %s43
      %s37 = sphi 0, %s35
      %s38 = sphi 0, %s36
      %s39 = sphi 0, %s37
      %s40 = sphi 0, %s38
      %s52 = sphi 0, %s54
      %s55 = sphi 0, %s52
      %s56 = sphi 0, %s55
      %s72 = sphi 0, %s56
      %s80 = sphi 0, %s82
      %s83 = sphi 0, %s80
      %s84 = sphi 0, %s83
      %s100 = sphi 0, %s84
      %s104 = sphi 0, %s104
      %s106 = sphi 0, %s104
      %s107 = sphi 0, %s106
      %s121 = sphi 0, %s107
      %s125 = sphi 0, %s125
      %s127 = sphi 0, %s125
      %s128 = sphi 0, %s127
      %s142 = sphi 0, %s128
      %s146 = sphi 0, %s146
      %s148 = sphi 0, %s146
      %s149 = sphi 0, %s148
      %s163 = sphi 0, %s149
      %s167 = sphi 0, %s167
      %s169 = sphi 0, %s167
      %s170 = sphi 0, %s169
      %s184 = sphi 0, %s170
      %s192 = sphi 0, %s194
      %s195 = sphi 0, %s192
      %s196 = sphi 0, %s195
      %s212 = sphi 0, %s196
      %s220 = sphi 0, %s222
      %s223 = sphi 0, %s220
      %s224 = sphi 0, %s223
      %s240 = sphi 0, %s224
    $region4: #{complex_conv_forward.1} parent=1 // loop_header_branch
      %31 = sbr.rel (%p29) target = $region8
    $region5: #{complex_conv_forward.1} parent=1 // loop_body
      %s33 = ssub.s32 %s28, 1
      %s34 = ssub.s32 %s28, 2
      %s41 = sadd.s32 1, %s36
      %p42 = scmp.ge.s32.totalorder %s41, 1
      %s43 = scalar_select %p42, 0, %s41
      %s44 = sadd.s32 1, %s35
      %s45 = scalar_select %p42, %s44, %s35
      %p46 = scmp.ge.s32.totalorder %s45, 2
      %s47 = scalar_select %p46, 0, %s45
      %s48 = ssub.s32 %s35, %s47
      %s49 = ssub.s32 %s36, %s43
      %s50 = sor.u32 %s48, %s49
      %p51 = scmp.eq.s32.totalorder %s50, 0
      %s53 = sadd.s32 %s52, 1
      %s54 = scalar_select %p51, %s52, %s53
      %p57 = pneg %p51
      %p58 = scmp.eq.s32.totalorder %s28, 1
      %p59 = por %p57, %p58
      %p60 = scmp.ne.s32.totalorder %s52, %s55
      %p61 = scmp.eq.s32.totalorder %s28, 0
      %p62 = por %p60, %p61
      %p63 = scmp.ne.s32.totalorder %s52, %s55
      %p64 = scmp.eq.s32.totalorder %s33, 1
      %p65 = por %p63, %p64
      %p66 = scmp.ne.s32.totalorder %s55, %s56
      %p67 = scmp.eq.s32.totalorder %s33, 0
      %p68 = por %p66, %p67
      %p69 = scmp.ne.s32.totalorder %s55, %s56
      %p70 = scmp.eq.s32.totalorder %s34, 1
      %p71 = por %p69, %p70
      %p73 = scmp.ne.s32.totalorder %s56, %s72
      %p74 = scmp.eq.s32.totalorder %s34, 0
      %p75 = por %p73, %p74
      %s76 = ssub.s32 %s35, %s47
      %s77 = ssub.s32 %s36, %s43
      %s78 = sor.u32 %s76, %s77
      %p79 = scmp.eq.s32.totalorder %s78, 0
      %s81 = sadd.s32 %s80, 1
      %s82 = scalar_select %p79, %s80, %s81
      %p85 = pneg %p79
      %p86 = scmp.eq.s32.totalorder %s28, 1
      %p87 = por %p85, %p86
      %p88 = scmp.ne.s32.totalorder %s80, %s83
      %p89 = scmp.eq.s32.totalorder %s28, 0
      %p90 = por %p88, %p89
      %p91 = scmp.ne.s32.totalorder %s80, %s83
      %p92 = scmp.eq.s32.totalorder %s33, 1
      %p93 = por %p91, %p92
      %p94 = scmp.ne.s32.totalorder %s83, %s84
      %p95 = scmp.eq.s32.totalorder %s33, 0
      %p96 = por %p94, %p95
      %p97 = scmp.ne.s32.totalorder %s83, %s84
      %p98 = scmp.eq.s32.totalorder %s34, 1
      %p99 = por %p97, %p98
      %p101 = scmp.ne.s32.totalorder %s84, %s100
      %p102 = scmp.eq.s32.totalorder %s34, 0
      %p103 = por %p101, %p102
      %s105 = sadd.s32 %s104, 1
      %p108 = scmp.eq.s32.totalorder %s28, 1
      %p109 = scmp.ne.s32.totalorder %s104, %s106
      %p110 = scmp.eq.s32.totalorder %s28, 0
      %p111 = por %p109, %p110
      %p112 = scmp.ne.s32.totalorder %s104, %s106
      %p113 = scmp.eq.s32.totalorder %s33, 1
      %p114 = por %p112, %p113
      %p115 = scmp.ne.s32.totalorder %s106, %s107
      %p116 = scmp.eq.s32.totalorder %s33, 0
      %p117 = por %p115, %p116
      %p118 = scmp.ne.s32.totalorder %s106, %s107
      %p119 = scmp.eq.s32.totalorder %s34, 1
      %p120 = por %p118, %p119
      %p122 = scmp.ne.s32.totalorder %s107, %s121
      %p123 = scmp.eq.s32.totalorder %s34, 0
      %p124 = por %p122, %p123
      %s126 = sadd.s32 %s125, 1
      %p129 = scmp.eq.s32.totalorder %s28, 1
      %p130 = scmp.ne.s32.totalorder %s125, %s127
      %p131 = scmp.eq.s32.totalorder %s28, 0
      %p132 = por %p130, %p131
      %p133 = scmp.ne.s32.totalorder %s125, %s127
      %p134 = scmp.eq.s32.totalorder %s33, 1
      %p135 = por %p133, %p134
      %p136 = scmp.ne.s32.totalorder %s127, %s128
      %p137 = scmp.eq.s32.totalorder %s33, 0
      %p138 = por %p136, %p137
      %p139 = scmp.ne.s32.totalorder %s127, %s128
      %p140 = scmp.eq.s32.totalorder %s34, 1
      %p141 = por %p139, %p140
      %p143 = scmp.ne.s32.totalorder %s128, %s142
      %p144 = scmp.eq.s32.totalorder %s34, 0
      %p145 = por %p143, %p144
      %s147 = sadd.s32 %s146, 1
      %p150 = scmp.eq.s32.totalorder %s28, 1
      %p151 = scmp.ne.s32.totalorder %s146, %s148
      %p152 = scmp.eq.s32.totalorder %s28, 0
      %p153 = por %p151, %p152
      %p154 = scmp.ne.s32.totalorder %s146, %s148
      %p155 = scmp.eq.s32.totalorder %s33, 1
      %p156 = por %p154, %p155
      %p157 = scmp.ne.s32.totalorder %s148, %s149
      %p158 = scmp.eq.s32.totalorder %s33, 0
      %p159 = por %p157, %p158
      %p160 = scmp.ne.s32.totalorder %s148, %s149
      %p161 = scmp.eq.s32.totalorder %s34, 1
      %p162 = por %p160, %p161
      %p164 = scmp.ne.s32.totalorder %s149, %s163
      %p165 = scmp.eq.s32.totalorder %s34, 0
      %p166 = por %p164, %p165
      %s168 = sadd.s32 %s167, 1
      %p171 = scmp.eq.s32.totalorder %s28, 1
      %p172 = scmp.ne.s32.totalorder %s167, %s169
      %p173 = scmp.eq.s32.totalorder %s28, 0
      %p174 = por %p172, %p173
      %p175 = scmp.ne.s32.totalorder %s167, %s169
      %p176 = scmp.eq.s32.totalorder %s33, 1
      %p177 = por %p175, %p176
      %p178 = scmp.ne.s32.totalorder %s169, %s170
      %p179 = scmp.eq.s32.totalorder %s33, 0
      %p180 = por %p178, %p179
      %p181 = scmp.ne.s32.totalorder %s169, %s170
      %p182 = scmp.eq.s32.totalorder %s34, 1
      %p183 = por %p181, %p182
      %p185 = scmp.ne.s32.totalorder %s170, %s184
      %p186 = scmp.eq.s32.totalorder %s34, 0
      %p187 = por %p185, %p186
      %s188 = ssub.s32 %s35, %s47
      %s189 = ssub.s32 %s36, %s43
      %s190 = sor.u32 %s188, %s189
      %p191 = scmp.eq.s32.totalorder %s190, 0
      %s193 = sadd.s32 %s192, 1
      %s194 = scalar_select %p191, %s192, %s193
      %p197 = pneg %p191
      %p198 = scmp.eq.s32.totalorder %s28, 1
      %p199 = por %p197, %p198
      %p200 = scmp.ne.s32.totalorder %s192, %s195
      %p201 = scmp.eq.s32.totalorder %s28, 0
      %p202 = por %p200, %p201
      %p203 = scmp.ne.s32.totalorder %s192, %s195
      %p204 = scmp.eq.s32.totalorder %s33, 1
      %p205 = por %p203, %p204
      %p206 = scmp.ne.s32.totalorder %s195, %s196
      %p207 = scmp.eq.s32.totalorder %s33, 0
      %p208 = por %p206, %p207
      %p209 = scmp.ne.s32.totalorder %s195, %s196
      %p210 = scmp.eq.s32.totalorder %s34, 1
      %p211 = por %p209, %p210
      %p213 = scmp.ne.s32.totalorder %s196, %s212
      %p214 = scmp.eq.s32.totalorder %s34, 0
      %p215 = por %p213, %p214
      %s216 = ssub.s32 %s35, %s47
      %s217 = ssub.s32 %s36, %s43
      %s218 = sor.u32 %s216, %s217
      %p219 = scmp.eq.s32.totalorder %s218, 0
      %s221 = sadd.s32 %s220, 1
      %s222 = scalar_select %p219, %s220, %s221
      %p225 = pneg %p219
      %p226 = scmp.eq.s32.totalorder %s28, 1
      %p227 = por %p225, %p226
      %p228 = scmp.ne.s32.totalorder %s220, %s223
      %p229 = scmp.eq.s32.totalorder %s28, 0
      %p230 = por %p228, %p229
      %p231 = scmp.ne.s32.totalorder %s220, %s223
      %p232 = scmp.eq.s32.totalorder %s33, 1
      %p233 = por %p231, %p232
      %p234 = scmp.ne.s32.totalorder %s223, %s224
      %p235 = scmp.eq.s32.totalorder %s33, 0
      %p236 = por %p234, %p235
      %p237 = scmp.ne.s32.totalorder %s223, %s224
      %p238 = scmp.eq.s32.totalorder %s34, 1
      %p239 = por %p237, %p238
      %p241 = scmp.ne.s32.totalorder %s224, %s240
      %p242 = scmp.eq.s32.totalorder %s34, 0
      %p243 = por %p241, %p242
      %p244 = scmp.le.s32.totalorder 1, %s28
      %p245 = scmp.lt.s32.totalorder %s28, 3
      %p246 = pnand %p244, %p245
      %p247 = pneg %p246
      // Predicated region
      $region9: #{complex_conv_forward.1} parent=5 // pred_check
        _
      $region10: #{complex_conv_forward.1} parent=5 // pred_check_branch
        %249 = sbr.rel (%p246) target = $region12
      $region11: #{complex_conv_forward.1} parent=5 // pred_region
        %s250 = ssub.s32 %s28, 1
        // Predicated region
        $region13: #{complex_conv_forward.1} parent=11 // pred_check
          %p251 = pneg %p117
        $region14: #{complex_conv_forward.1} parent=11 // pred_check_branch
          %253 = sbr.rel (%p251) target = $region16
        $region15: #{complex_conv_forward.1} parent=11 // pred_region
          %s255 = ssub.s32 512, 512
          %256 = vsyncadd [#allocation6], %s255
          %s257 = sshll.u32 [#allocation7], 4
          %s258 = int_to_ptr.vmem [resolvable:$true] %s257
          %263 = dma.hbm_to_vmem [thread:$0]  %s2, 512, %s258, [#allocation6], 128, 128, 8
        $region16: #{complex_conv_forward.1} parent=11 // pred_fallthru
          _
        // Predicated region
        $region17: #{complex_conv_forward.1} parent=11 // pred_check
          %p264 = pneg %p138
        $region18: #{complex_conv_forward.1} parent=11 // pred_check_branch
          %266 = sbr.rel (%p264) target = $region20
        $region19: #{complex_conv_forward.1} parent=11 // pred_region
          %s268 = ssub.s32 512, 512
          %269 = vsyncadd [#allocation9], %s268
          %s270 = sshll.u32 [#allocation8], 4
          %s271 = int_to_ptr.vmem [resolvable:$true] %s270
          %276 = dma.hbm_to_vmem [thread:$0]  %s3, 512, %s271, [#allocation9], 128, 128, 8
        $region20: #{complex_conv_forward.1} parent=11 // pred_fallthru
          _
        // Predicated region
        $region21: #{complex_conv_forward.1} parent=11 // pred_check
          %p277 = pneg %p159
        $region22: #{complex_conv_forward.1} parent=11 // pred_check_branch
          %279 = sbr.rel (%p277) target = $region24
        $region23: #{complex_conv_forward.1} parent=11 // pred_region
          %s281 = ssub.s32 512, 512
          %282 = vsyncadd [#allocation9], %s281
          %s283 = sshll.u32 [#allocation10], 4
          %s284 = int_to_ptr.vmem [resolvable:$true] %s283
          %289 = dma.hbm_to_vmem [thread:$0]  %s4, 512, %s284, [#allocation9], 128, 128, 8
        $region24: #{complex_conv_forward.1} parent=11 // pred_fallthru
          _
        // Predicated region
        $region25: #{complex_conv_forward.1} parent=11 // pred_check
          %p290 = pneg %p180
        $region26: #{complex_conv_forward.1} parent=11 // pred_check_branch
          %292 = sbr.rel (%p290) target = $region28
        $region27: #{complex_conv_forward.1} parent=11 // pred_region
          %s294 = ssub.s32 512, 512
          %295 = vsyncadd [#allocation12], %s294
          %s296 = sshll.u32 [#allocation11], 4
          %s297 = int_to_ptr.vmem [resolvable:$true] %s296
          %302 = dma.hbm_to_vmem [thread:$0]  %s5, 512, %s297, [#allocation12], 128, 128, 8
        $region28: #{complex_conv_forward.1} parent=11 // pred_fallthru
          _
      $region12: #{complex_conv_forward.1} parent=5 // pred_fallthru
        _
      %p303 = scmp.lt.s32.totalorder %s28, 2
      // Predicated region
      $region29: #{complex_conv_forward.1} parent=5 // pred_check
        %p304 = pneg %p303
      $region30: #{complex_conv_forward.1} parent=5 // pred_check_branch
        %306 = sbr.rel (%p304) target = $region32
      $region31: #{complex_conv_forward.1} parent=5 // pred_region
        // Predicated region
        $region33: #{complex_conv_forward.1} parent=31 // pred_check
          %p307 = pneg %p62
        $region34: #{complex_conv_forward.1} parent=31 // pred_check_branch
          %309 = sbr.rel (%p307) target = $region36
        $region35: #{complex_conv_forward.1} parent=31 // pred_region
          %s310 = sand.u32 %s52, 1
          %s311 = scalar_lea.sflag [#allocation3], %s310
          %s312 = sand.u32 %s52, 1
          %s313 = smul.addr %s312, 64
          %s314 = scalar_lea.vmem [#allocation2], %s313
          %s315 = smul.u32 2, %s36
          %s317 = ssub.s32 1024, 1024
          %318 = vsyncadd %s311, %s317
          %s319 = smul.addr %s35, 8
          %s320 = sadd.s32 %s315, %s319
          %s321 = smul.addr %s320, 128
          %s322 = scalar_lea.hbm %s0, %s321
          %s323 = sshll.u32 %s314, 4
          %s324 = int_to_ptr.vmem [resolvable:$true] %s323
          %329 = dma.hbm_to_vmem [thread:$0]  %s322, 1024, %s324, %s311, 256, 256, 16
        $region36: #{complex_conv_forward.1} parent=31 // pred_fallthru
          _
        // Predicated region
        $region37: #{complex_conv_forward.1} parent=31 // pred_check
          %p330 = pneg %p90
        $region38: #{complex_conv_forward.1} parent=31 // pred_check_branch
          %332 = sbr.rel (%p330) target = $region40
        $region39: #{complex_conv_forward.1} parent=31 // pred_region
          %s333 = sand.u32 %s28, 1
          %s334 = scalar_lea.sflag [#allocation6], %s333
          %s335 = sand.u32 %s80, 1
          %s336 = smul.addr %s335, 64
          %s337 = scalar_lea.vmem [#allocation5], %s336
          %s338 = smul.u32 2, %s36
          %s340 = ssub.s32 1024, 1024
          %341 = vsyncadd %s334, %s340
          %s342 = smul.addr %s35, 8
          %s343 = sadd.s32 %s338, %s342
          %s344 = smul.addr %s343, 128
          %s345 = scalar_lea.hbm %s1, %s344
          %s346 = sshll.u32 %s337, 4
          %s347 = int_to_ptr.vmem [resolvable:$true] %s346
          %352 = dma.hbm_to_vmem [thread:$0]  %s345, 1024, %s347, %s334, 256, 256, 16
        $region40: #{complex_conv_forward.1} parent=31 // pred_fallthru
          _
      $region32: #{complex_conv_forward.1} parent=5 // pred_fallthru
        _
      %p353 = scmp.le.s32.totalorder 1, %s28
      %p354 = scmp.lt.s32.totalorder %s28, 3
      %p355 = pnand %p353, %p354
      %p356 = pneg %p355
      // Predicated region
      $region41: #{complex_conv_forward.1} parent=5 // pred_check
        _
      $region42: #{complex_conv_forward.1} parent=5 // pred_check_branch
        %358 = sbr.rel (%p355) target = $region44
      $region43: #{complex_conv_forward.1} parent=5 // pred_region
        %s359 = ssub.s32 %s28, 1
        %s360 = sand.u32 %s55, 1
        %s361 = scalar_lea.sflag [#allocation3], %s360
        %s362 = sand.u32 %s55, 1
        %s363 = smul.addr %s362, 64
        %s364 = scalar_lea.vmem [#allocation2], %s363
        // Predicated region
        $region45: #{complex_conv_forward.1} parent=43 // pred_check
          %p365 = pneg %p68
        $region46: #{complex_conv_forward.1} parent=43 // pred_check_branch
          %367 = sbr.rel (%p365) target = $region48
        $region47: #{complex_conv_forward.1} parent=43 // pred_region
          %368 = dma.done %s361, 1024
        $region48: #{complex_conv_forward.1} parent=43 // pred_fallthru
          _
        %s369 = sand.u32 %s33, 1
        %s370 = scalar_lea.sflag [#allocation6], %s369
        %s371 = sand.u32 %s83, 1
        %s372 = smul.addr %s371, 64
        %s373 = scalar_lea.vmem [#allocation5], %s372
        // Predicated region
        $region49: #{complex_conv_forward.1} parent=43 // pred_check
          %p374 = pneg %p96
        $region50: #{complex_conv_forward.1} parent=43 // pred_check_branch
          %376 = sbr.rel (%p374) target = $region52
        $region51: #{complex_conv_forward.1} parent=43 // pred_region
          %377 = dma.done %s370, 1024
        $region52: #{complex_conv_forward.1} parent=43 // pred_fallthru
          _
        // Predicated region
        $region53: #{complex_conv_forward.1} parent=43 // pred_check
          %p378 = pneg %p117
        $region54: #{complex_conv_forward.1} parent=43 // pred_check_branch
          %380 = sbr.rel (%p378) target = $region56
        $region55: #{complex_conv_forward.1} parent=43 // pred_region
          %381 = dma.done [#allocation6], 512
        $region56: #{complex_conv_forward.1} parent=43 // pred_fallthru
          _
        // Predicated region
        $region57: #{complex_conv_forward.1} parent=43 // pred_check
          %p382 = pneg %p138
        $region58: #{complex_conv_forward.1} parent=43 // pred_check_branch
          %384 = sbr.rel (%p382) target = $region60
        $region59: #{complex_conv_forward.1} parent=43 // pred_region
          %385 = dma.done [#allocation9], 512
        $region60: #{complex_conv_forward.1} parent=43 // pred_fallthru
          _
        // Predicated region
        $region61: #{complex_conv_forward.1} parent=43 // pred_check
          %p386 = pneg %p159
        $region62: #{complex_conv_forward.1} parent=43 // pred_check_branch
          %388 = sbr.rel (%p386) target = $region64
        $region63: #{complex_conv_forward.1} parent=43 // pred_region
          %389 = dma.done [#allocation9], 512
        $region64: #{complex_conv_forward.1} parent=43 // pred_fallthru
          _
        // Predicated region
        $region65: #{complex_conv_forward.1} parent=43 // pred_check
          %p390 = pneg %p180
        $region66: #{complex_conv_forward.1} parent=43 // pred_check_branch
          %392 = sbr.rel (%p390) target = $region68
        $region67: #{complex_conv_forward.1} parent=43 // pred_region
          %393 = dma.done [#allocation12], 512
        $region68: #{complex_conv_forward.1} parent=43 // pred_fallthru
          _
        %s394 = sand.u32 %s55, 1
        %s395 = scalar_lea.sflag [#allocation3], %s394
        %s396 = sand.u32 %s55, 1
        %s397 = smul.addr %s396, 64
        %s398 = scalar_lea.vmem [#allocation2], %s397
        %p399 = pneg %p68
        %p400 = pneg %p65
        %s401 = sand.u32 %s33, 1
        %s402 = scalar_lea.sflag [#allocation6], %s401
        %s403 = sand.u32 %s83, 1
        %s404 = smul.addr %s403, 64
        %s405 = scalar_lea.vmem [#allocation5], %s404
        %p406 = pneg %p96
        %p407 = pneg %p93
        %p408 = pneg %p117
        %p409 = pneg %p114
        %p410 = pneg %p138
        %p411 = pneg %p135
        %p412 = pneg %p159
        %p413 = pneg %p156
        %p414 = pneg %p180
        %p415 = pneg %p177
        %p416 = pneg %p208
        %p417 = pneg %p205
        %s418 = sand.u32 %s195, 1
        %s419 = scalar_lea.sflag [#allocation4], %s418
        %s420 = sand.u32 %s195, 1
        %s421 = smul.addr %s420, 64
        %s422 = scalar_lea.vmem [#allocation13], %s421
        %p423 = pneg %p236
        %p424 = pneg %p233
        %s425 = sand.u32 %s223, 1
        %s426 = scalar_lea.sflag [#allocation15], %s425
        %s427 = sand.u32 %s223, 1
        %s428 = smul.addr %s427, 64
        %s429 = scalar_lea.vmem [#allocation14], %s428
        %s430 = smul.u32 2, %s38
        %s431 = smul.u32 2, %s38
        %s432 = smul.u32 2, %s38
        %s433 = smul.u32 2, %s38
        %v434 = vld [vmem:[%s364] sm:$0xff]
        %v435 = vld [vmem:[%s364 + $0x8] sm:$0xff]
        %v436 = vld [vmem:[%s364 + $0x10] sm:$0xff]
        %v437 = vld [vmem:[%s364 + $0x18] sm:$0xff]
        %v438 = vld [vmem:[%s364 + $0x20] sm:$0xff]
        %v439 = vld [vmem:[%s364 + $0x28] sm:$0xff]
        %v440 = vld [vmem:[%s364 + $0x30] sm:$0xff]
        %v441 = vld [vmem:[%s364 + $0x38] sm:$0xff]
        %v442 = vld [vmem:[%s373] sm:$0xff]
        %v443 = vld [vmem:[%s373 + $0x8] sm:$0xff]
        %v444 = vld [vmem:[%s373 + $0x10] sm:$0xff]
        %v445 = vld [vmem:[%s373 + $0x18] sm:$0xff]
        %v446 = vld [vmem:[%s373 + $0x20] sm:$0xff]
        %v447 = vld [vmem:[%s373 + $0x28] sm:$0xff]
        %v448 = vld [vmem:[%s373 + $0x30] sm:$0xff]
        %v449 = vld [vmem:[%s373 + $0x38] sm:$0xff]
        %v450 = vld [vmem:[#allocation7] sm:$0xff]
        %v451 = vld [vmem:[#allocation7 + $0x8] sm:$0xff]
        %v452 = vld [vmem:[#allocation7 + $0x10] sm:$0xff]
        %v453 = vld [vmem:[#allocation7 + $0x18] sm:$0xff]
        %v454 = vld [vmem:[#allocation8] sm:$0xff]
        %v455 = vld [vmem:[#allocation8 + $0x8] sm:$0xff]
        %v456 = vld [vmem:[#allocation8 + $0x10] sm:$0xff]
        %v457 = vld [vmem:[#allocation8 + $0x18] sm:$0xff]
        %vm458 = vcmask 261120
        %v460 = vsel %vm458, %v450, 0
        %v463 = vsel %vm458, %v451, 0
        %v466 = vsel %vm458, %v452, 0
        %v469 = vsel %vm458, %v453, 0
        %471 = vmatprep.subr.mxu0 %v435
        %472 = vmatpush1.msra.mxu0 %v434
        %473 = vmatprep.subr.mxu0 %v437
        %474 = vmatpush1.msra.mxu0 %v436
        %475 = vmatprep.subr.mxu0 %v439
        %476 = vmatpush1.msra.mxu0 %v438
        %477 = vmatprep.subr.mxu0 %v441
        %478 = vmatpush1.msra.mxu0 %v440
        %479 = vmatprep.subr.mxu0 0.0
        %480 = vmatpush1.msra.mxu0 0.0
        %481 = vmatprep.subr.mxu0 0.0
        %482 = vmatpush1.msra.mxu0 0.0
        %483 = vmatprep.subr.mxu0 0.0
        %484 = vmatpush1.msra.mxu0 0.0
        %485 = vmatprep.subr.mxu0 0.0
        %486 = vmatpush1.msra.mxu0 0.0
        %487 = vmatprep.subr.mxu0 0.0
        %488 = vmatpush1.msra.mxu0 0.0
        %489 = vmatprep.subr.mxu0 0.0
        %490 = vmatpush1.msra.mxu0 0.0
        %491 = vmatprep.subr.mxu0 0.0
        %492 = vmatpush1.msra.mxu0 0.0
        %493 = vmatprep.subr.mxu0 0.0
        %494 = vmatpush1.msra.mxu0 0.0
        %495 = vmatprep.subr.mxu0 0.0
        %496 = vmatpush1.msra.mxu0 0.0
        %497 = vmatprep.subr.mxu0 0.0
        %498 = vmatpush1.msra.mxu0 0.0
        %499 = vmatprep.subr.mxu0 0.0
        %500 = vmatpush1.msra.mxu0 0.0
        %501 = vmatprep.subr.mxu0 0.0
        %502 = vmatpush1.msra.mxu0 0.0
        %503 = vmatprep.subr.mxu0 0.0
        %504 = vmatpush1.msra.mxu0 0.0
        %505 = vmatprep.subr.mxu0 0.0
        %506 = vmatpush1.msra.mxu0 0.0
        %507 = vmatprep.subr.mxu0 0.0
        %508 = vmatpush1.msra.mxu0 0.0
        %509 = vmatprep.subr.mxu0 0.0
        %510 = vmatpush1.msra.mxu0 0.0
        %511 = vmatprep.subr.mxu0 0.0
        %512 = vmatpush1.msra.mxu0 0.0
        %513 = vmatprep.subr.mxu0 0.0
        %514 = vmatpush1.msra.mxu0 0.0
        %515 = vmatprep.subr.mxu0 0.0
        %516 = vmatpush1.msra.mxu0 0.0
        %517 = vmatprep.subr.mxu0 0.0
        %518 = vmatpush1.msra.mxu0 0.0
        %519 = vmatprep.subr.mxu0 0.0
        %520 = vmatpush1.msra.mxu0 0.0
        %521 = vmatprep.subr.mxu0 0.0
        %522 = vmatpush1.msra.mxu0 0.0
        %523 = vmatprep.subr.mxu0 0.0
        %524 = vmatpush1.msra.mxu0 0.0
        %525 = vmatprep.subr.mxu0 0.0
        %526 = vmatpush1.msra.mxu0 0.0
        %527 = vmatprep.subr.mxu0 0.0
        %528 = vmatpush1.msra.mxu0 0.0
        %529 = vmatprep.subr.mxu0 0.0
        %530 = vmatpush1.msra.mxu0 0.0
        %531 = vmatprep.subr.mxu0 0.0
        %532 = vmatpush1.msra.mxu0 0.0
        %533 = vmatprep.subr.mxu0 0.0
        %534 = vmatpush1.msra.mxu0 0.0
        %535 = vmatprep.mubr.f32.mxu0 0.0
        %536 = vmatmul.mubr.f32.gmra.mrb[0].mxu0 %v460
        %v537 = vpop.f32.mrb[0].mxu0
        %v538 = vadd.f32 0.0, %v537
        %v539 = vpop.f32.mrb[0].mxu0
        %v540 = vadd.f32 0.0, %v539
        %541 = vmatprep.mubr.f32.mxu0 0.0
        %542 = vmatmul.mubr.f32.gmra.mrb[0].mxu0 %v463
        %v543 = vpop.f32.mrb[0].mxu0
        %v544 = vadd.f32 0.0, %v543
        %v545 = vpop.f32.mrb[0].mxu0
        %v546 = vadd.f32 0.0, %v545
        %547 = vmatprep.mubr.f32.mxu0 0.0
        %548 = vmatmul.mubr.f32.gmra.mrb[0].mxu0 %v466
        %v549 = vpop.f32.mrb[0].mxu0
        %v550 = vadd.f32 0.0, %v549
        %v551 = vpop.f32.mrb[0].mxu0
        %v552 = vadd.f32 0.0, %v551
        %553 = vmatprep.mubr.f32.mxu0 0.0
        %554 = vmatmul.mubr.f32.gmra.mrb[0].mxu0 %v469
        %v555 = vpop.f32.mrb[0].mxu0
        %v556 = vadd.f32 0.0, %v555
        %v557 = vpop.f32.mrb[0].mxu0
        %v558 = vadd.f32 0.0, %v557
        %559 = vdwg.mxu0
        %v561 = vsel %vm458, %v454, 0
        %v564 = vsel %vm458, %v455, 0
        %v567 = vsel %vm458, %v456, 0
        %v570 = vsel %vm458, %v457, 0
        %572 = vmatprep.subr.mxu0 %v443
        %573 = vmatpush1.msra.mxu0 %v442
        %574 = vmatprep.subr.mxu0 %v445
        %575 = vmatpush1.msra.mxu0 %v444
        %576 = vmatprep.subr.mxu0 %v447
        %577 = vmatpush1.msra.mxu0 %v446
        %578 = vmatprep.subr.mxu0 %v449
        %579 = vmatpush1.msra.mxu0 %v448
        %580 = vmatprep.subr.mxu0 0.0
        %581 = vmatpush1.msra.mxu0 0.0
        %582 = vmatprep.subr.mxu0 0.0
        %583 = vmatpush1.msra.mxu0 0.0
        %584 = vmatprep.subr.mxu0 0.0
        %585 = vmatpush1.msra.mxu0 0.0
        %586 = vmatprep.subr.mxu0 0.0
        %587 = vmatpush1.msra.mxu0 0.0
        %588 = vmatprep.subr.mxu0 0.0
        %589 = vmatpush1.msra.mxu0 0.0
        %590 = vmatprep.subr.mxu0 0.0
        %591 = vmatpush1.msra.mxu0 0.0
        %592 = vmatprep.subr.mxu0 0.0
        %593 = vmatpush1.msra.mxu0 0.0
        %594 = vmatprep.subr.mxu0 0.0
        %595 = vmatpush1.msra.mxu0 0.0
        %596 = vmatprep.subr.mxu0 0.0
        %597 = vmatpush1.msra.mxu0 0.0
        %598 = vmatprep.subr.mxu0 0.0
        %599 = vmatpush1.msra.mxu0 0.0
        %600 = vmatprep.subr.mxu0 0.0
        %601 = vmatpush1.msra.mxu0 0.0
        %602 = vmatprep.subr.mxu0 0.0
        %603 = vmatpush1.msra.mxu0 0.0
        %604 = vmatprep.subr.mxu0 0.0
        %605 = vmatpush1.msra.mxu0 0.0
        %606 = vmatprep.subr.mxu0 0.0
        %607 = vmatpush1.msra.mxu0 0.0
        %608 = vmatprep.subr.mxu0 0.0
        %609 = vmatpush1.msra.mxu0 0.0
        %610 = vmatprep.subr.mxu0 0.0
        %611 = vmatpush1.msra.mxu0 0.0
        %612 = vmatprep.subr.mxu0 0.0
        %613 = vmatpush1.msra.mxu0 0.0
        %614 = vmatprep.subr.mxu0 0.0
        %615 = vmatpush1.msra.mxu0 0.0
        %616 = vmatprep.subr.mxu0 0.0
        %617 = vmatpush1.msra.mxu0 0.0
        %618 = vmatprep.subr.mxu0 0.0
        %619 = vmatpush1.msra.mxu0 0.0
        %620 = vmatprep.subr.mxu0 0.0
        %621 = vmatpush1.msra.mxu0 0.0
        %622 = vmatprep.subr.mxu0 0.0
        %623 = vmatpush1.msra.mxu0 0.0
        %624 = vmatprep.subr.mxu0 0.0
        %625 = vmatpush1.msra.mxu0 0.0
        %626 = vmatprep.subr.mxu0 0.0
        %627 = vmatpush1.msra.mxu0 0.0
        %628 = vmatprep.subr.mxu0 0.0
        %629 = vmatpush1.msra.mxu0 0.0
        %630 = vmatprep.subr.mxu0 0.0
        %631 = vmatpush1.msra.mxu0 0.0
        %632 = vmatprep.subr.mxu0 0.0
        %633 = vmatpush1.msra.mxu0 0.0
        %634 = vmatprep.subr.mxu0 0.0
        %635 = vmatpush1.msra.mxu0 0.0
        %636 = vmatprep.mubr.f32.mxu0 0.0
        %637 = vmatmul.mubr.f32.gmra.mrb[0].mxu0 %v561
        %v638 = vpop.f32.mrb[0].mxu0
        %v639 = vadd.f32 0.0, %v638
        %v640 = vpop.f32.mrb[0].mxu0
        %v641 = vadd.f32 0.0, %v640
        %642 = vmatprep.mubr.f32.mxu0 0.0
        %643 = vmatmul.mubr.f32.gmra.mrb[0].mxu0 %v564
        %v644 = vpop.f32.mrb[0].mxu0
        %v645 = vadd.f32 0.0, %v644
        %v646 = vpop.f32.mrb[0].mxu0
        %v647 = vadd.f32 0.0, %v646
        %648 = vmatprep.mubr.f32.mxu0 0.0
        %649 = vmatmul.mubr.f32.gmra.mrb[0].mxu0 %v567
        %v650 = vpop.f32.mrb[0].mxu0
        %v651 = vadd.f32 0.0, %v650
        %v652 = vpop.f32.mrb[0].mxu0
        %v653 = vadd.f32 0.0, %v652
        %654 = vmatprep.mubr.f32.mxu0 0.0
        %655 = vmatmul.mubr.f32.gmra.mrb[0].mxu0 %v570
        %v656 = vpop.f32.mrb[0].mxu0
        %v657 = vadd.f32 0.0, %v656
        %v658 = vpop.f32.mrb[0].mxu0
        %v659 = vadd.f32 0.0, %v658
        %660 = vdwg.mxu0
        %661 = vmatprep.subr.mxu0 %v435
        %662 = vmatpush1.msra.mxu0 %v434
        %663 = vmatprep.subr.mxu0 %v437
        %664 = vmatpush1.msra.mxu0 %v436
        %665 = vmatprep.subr.mxu0 %v439
        %666 = vmatpush1.msra.mxu0 %v438
        %667 = vmatprep.subr.mxu0 %v441
        %668 = vmatpush1.msra.mxu0 %v440
        %669 = vmatprep.subr.mxu0 0.0
        %670 = vmatpush1.msra.mxu0 0.0
        %671 = vmatprep.subr.mxu0 0.0
        %672 = vmatpush1.msra.mxu0 0.0
        %673 = vmatprep.subr.mxu0 0.0
        %674 = vmatpush1.msra.mxu0 0.0
        %675 = vmatprep.subr.mxu0 0.0
        %676 = vmatpush1.msra.mxu0 0.0
        %677 = vmatprep.subr.mxu0 0.0
        %678 = vmatpush1.msra.mxu0 0.0
        %679 = vmatprep.subr.mxu0 0.0
        %680 = vmatpush1.msra.mxu0 0.0
        %681 = vmatprep.subr.mxu0 0.0
        %682 = vmatpush1.msra.mxu0 0.0
        %683 = vmatprep.subr.mxu0 0.0
        %684 = vmatpush1.msra.mxu0 0.0
        %685 = vmatprep.subr.mxu0 0.0
        %686 = vmatpush1.msra.mxu0 0.0
        %687 = vmatprep.subr.mxu0 0.0
        %688 = vmatpush1.msra.mxu0 0.0
        %689 = vmatprep.subr.mxu0 0.0
        %690 = vmatpush1.msra.mxu0 0.0
        %691 = vmatprep.subr.mxu0 0.0
        %692 = vmatpush1.msra.mxu0 0.0
        %693 = vmatprep.subr.mxu0 0.0
        %694 = vmatpush1.msra.mxu0 0.0
        %695 = vmatprep.subr.mxu0 0.0
        %696 = vmatpush1.msra.mxu0 0.0
        %697 = vmatprep.subr.mxu0 0.0
        %698 = vmatpush1.msra.mxu0 0.0
        %699 = vmatprep.subr.mxu0 0.0
        %700 = vmatpush1.msra.mxu0 0.0
        %701 = vmatprep.subr.mxu0 0.0
        %702 = vmatpush1.msra.mxu0 0.0
        %703 = vmatprep.subr.mxu0 0.0
        %704 = vmatpush1.msra.mxu0 0.0
        %705 = vmatprep.subr.mxu0 0.0
        %706 = vmatpush1.msra.mxu0 0.0
        %707 = vmatprep.subr.mxu0 0.0
        %708 = vmatpush1.msra.mxu0 0.0
        %709 = vmatprep.subr.mxu0 0.0
        %710 = vmatpush1.msra.mxu0 0.0
        %711 = vmatprep.subr.mxu0 0.0
        %712 = vmatpush1.msra.mxu0 0.0
        %713 = vmatprep.subr.mxu0 0.0
        %714 = vmatpush1.msra.mxu0 0.0
        %715 = vmatprep.subr.mxu0 0.0
        %716 = vmatpush1.msra.mxu0 0.0
        %717 = vmatprep.subr.mxu0 0.0
        %718 = vmatpush1.msra.mxu0 0.0
        %719 = vmatprep.subr.mxu0 0.0
        %720 = vmatpush1.msra.mxu0 0.0
        %721 = vmatprep.subr.mxu0 0.0
        %722 = vmatpush1.msra.mxu0 0.0
        %723 = vmatprep.subr.mxu0 0.0
        %724 = vmatpush1.msra.mxu0 0.0
        %725 = vmatprep.mubr.f32.mxu0 0.0
        %726 = vmatmul.mubr.f32.gmra.mrb[0].mxu0 %v561
        %v727 = vpop.f32.mrb[0].mxu0
        %v728 = vadd.f32 0.0, %v727
        %v729 = vpop.f32.mrb[0].mxu0
        %v730 = vadd.f32 0.0, %v729
        %731 = vmatprep.mubr.f32.mxu0 0.0
        %732 = vmatmul.mubr.f32.gmra.mrb[0].mxu0 %v564
        %v733 = vpop.f32.mrb[0].mxu0
        %v734 = vadd.f32 0.0, %v733
        %v735 = vpop.f32.mrb[0].mxu0
        %v736 = vadd.f32 0.0, %v735
        %737 = vmatprep.mubr.f32.mxu0 0.0
        %738 = vmatmul.mubr.f32.gmra.mrb[0].mxu0 %v567
        %v739 = vpop.f32.mrb[0].mxu0
        %v740 = vadd.f32 0.0, %v739
        %v741 = vpop.f32.mrb[0].mxu0
        %v742 = vadd.f32 0.0, %v741
        %743 = vmatprep.mubr.f32.mxu0 0.0
        %744 = vmatmul.mubr.f32.gmra.mrb[0].mxu0 %v570
        %v745 = vpop.f32.mrb[0].mxu0
        %v746 = vadd.f32 0.0, %v745
        %v747 = vpop.f32.mrb[0].mxu0
        %v748 = vadd.f32 0.0, %v747
        %749 = vdwg.mxu0
        %v750 = vsub.f32 %v538, %v639
        %v751 = vsub.f32 %v540, %v641
        %v752 = vsub.f32 %v544, %v645
        %v753 = vsub.f32 %v546, %v647
        %v754 = vsub.f32 %v550, %v651
        %v755 = vsub.f32 %v552, %v653
        %v756 = vsub.f32 %v556, %v657
        %v757 = vsub.f32 %v558, %v659
        %v758 = vld [vmem:[#allocation10] sm:$0xff]
        %v759 = vld [vmem:[#allocation10 + $0x8] sm:$0xff]
        %v760 = vld [vmem:[#allocation10 + $0x10] sm:$0xff]
        %v761 = vld [vmem:[#allocation10 + $0x18] sm:$0xff]
        %763 = vset.pattern.permute.xlu0 0
        %764 = vperm.xlu0 %763, %v758
        %v765 = vpop.permute.xlu0 %764
        %768 = vset.pattern.permute.xlu0 0
        %769 = vperm.xlu0 %768, %v759
        %v770 = vpop.permute.xlu0 %769
        %773 = vset.pattern.permute.xlu0 0
        %774 = vperm.xlu0 %773, %v760
        %v775 = vpop.permute.xlu0 %774
        %778 = vset.pattern.permute.xlu0 0
        %779 = vperm.xlu0 %778, %v761
        %v780 = vpop.permute.xlu0 %779
        %v782 = vadd.f32 %v750, %v765
        %v783 = vadd.f32 %v751, %v765
        %v784 = vadd.f32 %v752, %v770
        %v785 = vadd.f32 %v753, %v770
        %v786 = vadd.f32 %v754, %v775
        %v787 = vadd.f32 %v755, %v775
        %v788 = vadd.f32 %v756, %v780
        %v789 = vadd.f32 %v757, %v780
        %790 = vst [vmem:[%s422] sm:$0xff] %v782
        %791 = vst [vmem:[%s422 + $0x8] sm:$0xff] %v783
        %792 = vst [vmem:[%s422 + $0x10] sm:$0xff] %v784
        %793 = vst [vmem:[%s422 + $0x18] sm:$0xff] %v785
        %794 = vst [vmem:[%s422 + $0x20] sm:$0xff] %v786
        %795 = vst [vmem:[%s422 + $0x28] sm:$0xff] %v787
        %796 = vst [vmem:[%s422 + $0x30] sm:$0xff] %v788
        %797 = vst [vmem:[%s422 + $0x38] sm:$0xff] %v789
        %798 = vmatprep.subr.mxu0 %v443
        %799 = vmatpush1.msra.mxu0 %v442
        %800 = vmatprep.subr.mxu0 %v445
        %801 = vmatpush1.msra.mxu0 %v444
        %802 = vmatprep.subr.mxu0 %v447
        %803 = vmatpush1.msra.mxu0 %v446
        %804 = vmatprep.subr.mxu0 %v449
        %805 = vmatpush1.msra.mxu0 %v448
        %806 = vmatprep.subr.mxu0 0.0
        %807 = vmatpush1.msra.mxu0 0.0
        %808 = vmatprep.subr.mxu0 0.0
        %809 = vmatpush1.msra.mxu0 0.0
        %810 = vmatprep.subr.mxu0 0.0
        %811 = vmatpush1.msra.mxu0 0.0
        %812 = vmatprep.subr.mxu0 0.0
        %813 = vmatpush1.msra.mxu0 0.0
        %814 = vmatprep.subr.mxu0 0.0
        %815 = vmatpush1.msra.mxu0 0.0
        %816 = vmatprep.subr.mxu0 0.0
        %817 = vmatpush1.msra.mxu0 0.0
        %818 = vmatprep.subr.mxu0 0.0
        %819 = vmatpush1.msra.mxu0 0.0
        %820 = vmatprep.subr.mxu0 0.0
        %821 = vmatpush1.msra.mxu0 0.0
        %822 = vmatprep.subr.mxu0 0.0
        %823 = vmatpush1.msra.mxu0 0.0
        %824 = vmatprep.subr.mxu0 0.0
        %825 = vmatpush1.msra.mxu0 0.0
        %826 = vmatprep.subr.mxu0 0.0
        %827 = vmatpush1.msra.mxu0 0.0
        %828 = vmatprep.subr.mxu0 0.0
        %829 = vmatpush1.msra.mxu0 0.0
        %830 = vmatprep.subr.mxu0 0.0
        %831 = vmatpush1.msra.mxu0 0.0
        %832 = vmatprep.subr.mxu0 0.0
        %833 = vmatpush1.msra.mxu0 0.0
        %834 = vmatprep.subr.mxu0 0.0
        %835 = vmatpush1.msra.mxu0 0.0
        %836 = vmatprep.subr.mxu0 0.0
        %837 = vmatpush1.msra.mxu0 0.0
        %838 = vmatprep.subr.mxu0 0.0
        %839 = vmatpush1.msra.mxu0 0.0
        %840 = vmatprep.subr.mxu0 0.0
        %841 = vmatpush1.msra.mxu0 0.0
        %842 = vmatprep.subr.mxu0 0.0
        %843 = vmatpush1.msra.mxu0 0.0
        %844 = vmatprep.subr.mxu0 0.0
        %845 = vmatpush1.msra.mxu0 0.0
        %846 = vmatprep.subr.mxu0 0.0
        %847 = vmatpush1.msra.mxu0 0.0
        %848 = vmatprep.subr.mxu0 0.0
        %849 = vmatpush1.msra.mxu0 0.0
        %850 = vmatprep.subr.mxu0 0.0
        %851 = vmatpush1.msra.mxu0 0.0
        %852 = vmatprep.subr.mxu0 0.0
        %853 = vmatpush1.msra.mxu0 0.0
        %854 = vmatprep.subr.mxu0 0.0
        %855 = vmatpush1.msra.mxu0 0.0
        %856 = vmatprep.subr.mxu0 0.0
        %857 = vmatpush1.msra.mxu0 0.0
        %858 = vmatprep.subr.mxu0 0.0
        %859 = vmatpush1.msra.mxu0 0.0
        %860 = vmatprep.subr.mxu0 0.0
        %861 = vmatpush1.msra.mxu0 0.0
        %862 = vmatprep.mubr.f32.mxu0 0.0
        %863 = vmatmul.mubr.f32.gmra.mrb[0].mxu0 %v460
        %v864 = vpop.f32.mrb[0].mxu0
        %v865 = vadd.f32 %v728, %v864
        %v866 = vpop.f32.mrb[0].mxu0
        %v867 = vadd.f32 %v730, %v866
        %868 = vmatprep.mubr.f32.mxu0 0.0
        %869 = vmatmul.mubr.f32.gmra.mrb[0].mxu0 %v463
        %v870 = vpop.f32.mrb[0].mxu0
        %v871 = vadd.f32 %v734, %v870
        %v872 = vpop.f32.mrb[0].mxu0
        %v873 = vadd.f32 %v736, %v872
        %874 = vmatprep.mubr.f32.mxu0 0.0
        %875 = vmatmul.mubr.f32.gmra.mrb[0].mxu0 %v466
        %v876 = vpop.f32.mrb[0].mxu0
        %v877 = vadd.f32 %v740, %v876
        %v878 = vpop.f32.mrb[0].mxu0
        %v879 = vadd.f32 %v742, %v878
        %880 = vmatprep.mubr.f32.mxu0 0.0
        %881 = vmatmul.mubr.f32.gmra.mrb[0].mxu0 %v469
        %v882 = vpop.f32.mrb[0].mxu0
        %v883 = vadd.f32 %v746, %v882
        %v884 = vpop.f32.mrb[0].mxu0
        %v885 = vadd.f32 %v748, %v884
        %886 = vdwg.mxu0
        %v887 = vld [vmem:[#allocation11] sm:$0xff]
        %v888 = vld [vmem:[#allocation11 + $0x8] sm:$0xff]
        %v889 = vld [vmem:[#allocation11 + $0x10] sm:$0xff]
        %v890 = vld [vmem:[#allocation11 + $0x18] sm:$0xff]
        %892 = vset.pattern.permute.xlu0 0
        %893 = vperm.xlu0 %892, %v887
        %v894 = vpop.permute.xlu0 %893
        %897 = vset.pattern.permute.xlu0 0
        %898 = vperm.xlu0 %897, %v888
        %v899 = vpop.permute.xlu0 %898
        %902 = vset.pattern.permute.xlu0 0
        %903 = vperm.xlu0 %902, %v889
        %v904 = vpop.permute.xlu0 %903
        %907 = vset.pattern.permute.xlu0 0
        %908 = vperm.xlu0 %907, %v890
        %v909 = vpop.permute.xlu0 %908
        %v911 = vadd.f32 %v865, %v894
        %v912 = vadd.f32 %v867, %v894
        %v913 = vadd.f32 %v871, %v899
        %v914 = vadd.f32 %v873, %v899
        %v915 = vadd.f32 %v877, %v904
        %v916 = vadd.f32 %v879, %v904
        %v917 = vadd.f32 %v883, %v909
        %v918 = vadd.f32 %v885, %v909
        %919 = vst [vmem:[%s429] sm:$0xff] %v911
        %920 = vst [vmem:[%s429 + $0x8] sm:$0xff] %v912
        %921 = vst [vmem:[%s429 + $0x10] sm:$0xff] %v913
        %922 = vst [vmem:[%s429 + $0x18] sm:$0xff] %v914
        %923 = vst [vmem:[%s429 + $0x20] sm:$0xff] %v915
        %924 = vst [vmem:[%s429 + $0x28] sm:$0xff] %v916
        %925 = vst [vmem:[%s429 + $0x30] sm:$0xff] %v917
        %926 = vst [vmem:[%s429 + $0x38] sm:$0xff] %v918
        %s927 = sand.u32 %s195, 1
        %s928 = scalar_lea.sflag [#allocation4], %s927
        %s929 = sand.u32 %s195, 1
        %s930 = smul.addr %s929, 64
        %s931 = scalar_lea.vmem [#allocation13], %s930
        %s932 = sand.u32 %s223, 1
        %s933 = scalar_lea.sflag [#allocation15], %s932
        %s934 = sand.u32 %s223, 1
        %s935 = smul.addr %s934, 64
        %s936 = scalar_lea.vmem [#allocation14], %s935
        // Predicated region
        $region69: #{complex_conv_forward.1} parent=43 // pred_check
          %p937 = pneg %p205
        $region70: #{complex_conv_forward.1} parent=43 // pred_check_branch
          %939 = sbr.rel (%p937) target = $region72
        $region71: #{complex_conv_forward.1} parent=43 // pred_region
          %s940 = smul.u32 2, %s38
          %s942 = ssub.s32 1024, 1024
          %943 = vsyncadd %s928, %s942
          %s944 = smul.addr %s37, 8
          %s945 = sadd.s32 %s940, %s944
          %s946 = smul.addr %s945, 128
          %s947 = scalar_lea.hbm %s6, %s946
          %s948 = sshll.u32 %s931, 4
          %s949 = int_to_ptr.vmem [resolvable:$true] %s948
          %954 = dma.vmem_to_hbm [thread:$0]  %s949, 1024, %s947, %s928, 256, 256, 16
        $region72: #{complex_conv_forward.1} parent=43 // pred_fallthru
          _
        // Predicated region
        $region73: #{complex_conv_forward.1} parent=43 // pred_check
          %p955 = pneg %p233
        $region74: #{complex_conv_forward.1} parent=43 // pred_check_branch
          %957 = sbr.rel (%p955) target = $region76
        $region75: #{complex_conv_forward.1} parent=43 // pred_region
          %s958 = smul.u32 2, %s38
          %s960 = ssub.s32 1024, 1024
          %961 = vsyncadd %s933, %s960
          %s962 = smul.addr %s37, 8
          %s963 = sadd.s32 %s958, %s962
          %s964 = smul.addr %s963, 128
          %s965 = scalar_lea.hbm %s7, %s964
          %s966 = sshll.u32 %s936, 4
          %s967 = int_to_ptr.vmem [resolvable:$true] %s966
          %972 = dma.vmem_to_hbm [thread:$0]  %s967, 1024, %s965, %s933, 256, 256, 16
        $region76: #{complex_conv_forward.1} parent=43 // pred_fallthru
          _
      $region44: #{complex_conv_forward.1} parent=5 // pred_fallthru
        _
      %p973 = scmp.le.s32.totalorder 2, %s28
      // Predicated region
      $region77: #{complex_conv_forward.1} parent=5 // pred_check
        %p974 = pneg %p973
      $region78: #{complex_conv_forward.1} parent=5 // pred_check_branch
        %976 = sbr.rel (%p974) target = $region80
      $region79: #{complex_conv_forward.1} parent=5 // pred_region
        %s977 = ssub.s32 %s28, 2
        // Predicated region
        $region81: #{complex_conv_forward.1} parent=79 // pred_check
          %p978 = pneg %p211
        $region82: #{complex_conv_forward.1} parent=79 // pred_check_branch
          %980 = sbr.rel (%p978) target = $region84
        $region83: #{complex_conv_forward.1} parent=79 // pred_region
          %s981 = sand.u32 %s196, 1
          %s982 = scalar_lea.sflag [#allocation4], %s981
          %s983 = sand.u32 %s196, 1
          %s984 = smul.addr %s983, 64
          %s985 = scalar_lea.vmem [#allocation13], %s984
          %986 = dma.done %s982, 1024
        $region84: #{complex_conv_forward.1} parent=79 // pred_fallthru
          _
        // Predicated region
        $region85: #{complex_conv_forward.1} parent=79 // pred_check
          %p987 = pneg %p239
        $region86: #{complex_conv_forward.1} parent=79 // pred_check_branch
          %989 = sbr.rel (%p987) target = $region88
        $region87: #{complex_conv_forward.1} parent=79 // pred_region
          %s990 = sand.u32 %s224, 1
          %s991 = scalar_lea.sflag [#allocation15], %s990
          %s992 = sand.u32 %s224, 1
          %s993 = smul.addr %s992, 64
          %s994 = scalar_lea.vmem [#allocation14], %s993
          %995 = dma.done %s991, 1024
        $region88: #{complex_conv_forward.1} parent=79 // pred_fallthru
          _
      $region80: #{complex_conv_forward.1} parent=5 // pred_fallthru
        _
    $region6: #{complex_conv_forward.1} parent=1 // loop_footer
      %s32 = sadd.s32 1, %s28
    $region7: #{complex_conv_forward.1} parent=1 // loop_footer_branch
      %27 = sbr.rel target = $region3
    $region8: #{complex_conv_forward.1} parent=1 // loop_exit
      _
    %996 = vsyncpa [#allocation3], 1
    %s997 = scalar_lea.sflag [#allocation3], 1
    %998 = vsyncpa %s997, 1
    %999 = vsyncpa [#allocation6], 1
    %s1000 = scalar_lea.sflag [#allocation6], 1
    %1001 = vsyncpa %s1000, 1
    %1002 = vsyncpa [#allocation9], 1
    %1003 = vsyncpa [#allocation12], 1
    %1004 = vsyncpa [#allocation4], 1
    %s1005 = scalar_lea.sflag [#allocation4], 1
    %1006 = vsyncpa %s1005, 1
    %1007 = vsyncpa [#allocation15], 1
    %s1008 = scalar_lea.sflag [#allocation15], 1
    %1009 = vsyncpa %s1008, 1

</llo_original>
